<compile_context>
chip_gen: v7x
topology: tpu7x:2x2x1
jax: 0.10.0
libtpu: 0.0.40
codegen_flags: <defaults>
</compile_context>

<pallas_src>
import functools

import jax
import jax.numpy as jnp
from jax.experimental import pallas as pl
from jax.experimental.pallas import tpu as pltpu

LANE = 128       # class axis padded to a multiple of the vreg lane width
SUBLANE = 8      # batch tile is a multiple of the vreg sublane width
NEG_LARGE = -1e30  # finite "-inf": exp() underflows to exactly 0, no NaN risk


def _round_up(x, m):
    return (x + m - 1) // m * m


def softmax_classifier_kernel(x_ref, w_ref, b_ref, o_ref):
    """One (TB, D)bf16 @ (D, Cp)bf16 tile -> f32 logits + bias -> stable softmax.

    Padded class columns carry a -1e30 bias, so exp() maps them to exactly 0
    and they contribute nothing to the row max/sum — no in-kernel masking.
    """
    logits = jnp.dot(x_ref[...], w_ref[...],
                     preferred_element_type=jnp.float32) + b_ref[...]
    m = jnp.max(logits, axis=-1, keepdims=True)
    e = jnp.exp(logits - m)
    denom = jnp.sum(e, axis=-1, keepdims=True)
    # approx=True lowers the divide to the (otherwise idle) EUP vrcp slot.
    o_ref[...] = (e * pl.reciprocal(denom, approx=True)).astype(o_ref.dtype)


def prepare_params(weight, bias, num_labels_padded):
    """One-time parameter prep (setup cost, NOT per forward call):
    nn.Linear weight (C, D) -> lane-dense, transposed, zero-padded (D, Cp) in
    bf16; bias -> (1, Cp) f32 with a large negative value in padded columns so
    softmax assigns them exactly zero probability."""
    C, D = weight.shape
    w_t = (jnp.zeros((D, num_labels_padded), jnp.float32)
           .at[:, :C].set(weight.T.astype(jnp.float32))
           .astype(jnp.bfloat16))
    b_p = (jnp.full((1, num_labels_padded), NEG_LARGE, jnp.float32)
           .at[:, :C].set(bias.astype(jnp.float32)))
    return w_t, b_p


@functools.partial(jax.jit, static_argnames=("num_labels", "block_b"))
def softmax_classifier(x, w_padded, b_padded, *, num_labels, block_b=256):
    """x: (B, D); w_padded: (D, Cp) bf16; b_padded: (1, Cp) f32. Returns (B, C) f32."""
    B, D = x.shape
    Cp = w_padded.shape[1]

    # Halve x's HBM/VMEM traffic; the dot still accumulates in f32.
    x = x.astype(jnp.bfloat16)

    # Batch tile: multiple of 8 sublanes, capped at block_b. No host-side
    # padding copy — Pallas masks the ragged last block.
    TB = min(_round_up(B, SUBLANE), block_b)
    grid_b = pl.cdiv(B, TB)

    cost = pl.CostEstimate(
        flops=2 * B * D * Cp,
        transcendentals=B * Cp,
        bytes_accessed=B * D * 2 + D * Cp * 2 + Cp * 4 + B * Cp * 4,
    )

    # VMEM budget: 2*TB*D*2 (x, double-buffered bf16) + D*Cp*2 (weight, single-
    # buffered bf16) + Cp*4 (bias) + 2*TB*Cp*4 (out, double-buffered f32).
    out = pl.pallas_call(
        softmax_classifier_kernel,
        out_shape=jax.ShapeDtypeStruct((B, Cp), jnp.float32),
        grid_spec=pltpu.PrefetchScalarGridSpec(
            num_scalar_prefetch=0,
            grid=(grid_b,),
            in_specs=[
                # x: tiled over batch (default double-buffered pipelining).
                pl.BlockSpec((TB, D), lambda i: (i, 0)),
                # weight/bias: constant index_map -> single-buffer (save VMEM).
                pl.BlockSpec((D, Cp), lambda i: (0, 0),
                             pipeline_mode=pl.Buffered(1)),
                pl.BlockSpec((1, Cp), lambda i: (0, 0),
                             pipeline_mode=pl.Buffered(1)),
            ],
            out_specs=pl.BlockSpec((TB, Cp), lambda i: (i, 0)),
        ),
        compiler_params=pltpu.CompilerParams(
            # Batch tiles are independent -> shardable across v7x's two TCs.
            dimension_semantics=("parallel",),
            # v5e's scoped-VMEM default is 16 MiB; 64 MiB is safe everywhere.
            vmem_limit_bytes=64 * 1024 * 1024),
        cost_estimate=cost,
    )(x, w_padded, b_padded)

    return out[:, :num_labels]


if __name__ == "__main__":
    key = jax.random.PRNGKey(0)
    k_x, k_w, k_b = jax.random.split(key, 3)

    B, D, C = 8, 32, 10  # batch, input_dim, num_labels

    x = jax.random.normal(k_x, (B, D), dtype=jnp.float32)
    # Deterministic init mimicking nn.Linear's uniform(-1/sqrt(D), 1/sqrt(D)).
    bound = 1.0 / (D ** 0.5)
    weight = jax.random.uniform(k_w, (C, D), jnp.float32, -bound, bound)
    bias = jax.random.uniform(k_b, (C,), jnp.float32, -bound, bound)

    Cp = _round_up(C, LANE)                      # 10 -> 128 lane-dense classes
    w_p, b_p = prepare_params(weight, bias, Cp)  # one-time setup cost

    out = softmax_classifier(x, w_p, b_p, num_labels=C)
    out = jax.block_until_ready(out)

    # Reference in plain JAX. Tolerances account for bf16 operands and the
    # approximate EUP reciprocal in the softmax denominator.
    ref = jax.nn.softmax(x @ weight.T + bias, axis=1)
    assert out.shape == (B, C)
    assert jnp.allclose(out, ref, atol=2e-2, rtol=2e-2)
    assert jnp.allclose(jnp.sum(out, axis=1), 1.0, atol=1e-2)

    print("KERNEL_OK")
</pallas_src>

<mosaic_0001>
module attributes {stable_mosaic.version = 11 : i64} {
  func.func @softmax_classifier_kernel(%arg0: i32, %arg1: memref<8x32xbf16, #tpu.memory_space<vmem>>, %arg2: memref<32x128xbf16, #tpu.memory_space<vmem>>, %arg3: memref<1x128xf32, #tpu.memory_space<vmem>>, %arg4: memref<8x128xf32, #tpu.memory_space<vmem>>) attributes {dimension_semantics = [#tpu.dimension_semantics<parallel>], iteration_bounds = array<i64: 1>, scalar_prefetch = 0 : i64, scratch_operands = 0 : i64, tpu.core_type = #tpu.core_type<tc>, window_params = [{transform_indices = @transform_0, window_bounds = array<i64: 8, 32>}, {pipeline_mode = #tpu.pipeline_mode<synchronous>, transform_indices = @transform_1, window_bounds = array<i64: 32, 128>}, {pipeline_mode = #tpu.pipeline_mode<synchronous>, transform_indices = @transform_2, window_bounds = array<i64: 1, 128>}, {transform_indices = @transform_3, window_bounds = array<i64: 8, 128>}]} {
    %c0 = arith.constant 0 : index
    %c0_0 = arith.constant 0 : index
    %0 = vector.load %arg1[%c0, %c0_0] : memref<8x32xbf16, #tpu.memory_space<vmem>>, vector<8x32xbf16>
    %c0_1 = arith.constant 0 : index
    %c0_2 = arith.constant 0 : index
    %1 = vector.load %arg2[%c0_1, %c0_2] : memref<32x128xbf16, #tpu.memory_space<vmem>>, vector<32x128xbf16>
    %cst = arith.constant dense<0.000000e+00> : vector<8x128xf32>
    %2 = tpu.matmul %0, %1, %cst {dimension_numbers = #tpu.dot_dimension_numbers<[1], [0], [0], [1], [0, 0, 1, 1], [], []>} : vector<8x32xbf16>, vector<32x128xbf16>, vector<8x128xf32> -> vector<8x128xf32>
    %c0_3 = arith.constant 0 : index
    %c0_4 = arith.constant 0 : index
    %3 = vector.load %arg3[%c0_3, %c0_4] : memref<1x128xf32, #tpu.memory_space<vmem>>, vector<1x128xf32>
    %4 = vector.broadcast %3 : vector<1x128xf32> to vector<8x128xf32>
    %5 = arith.addf %2, %4 : vector<8x128xf32>
    %cst_5 = arith.constant dense<0xFF800000> : vector<8xf32>
    %6 = vector.multi_reduction <maximumf>, %5, %cst_5 [1] : vector<8x128xf32> to vector<8xf32>
    %7 = vector.shape_cast %6 : vector<8xf32> to vector<8x1xf32>
    %8 = vector.broadcast %7 : vector<8x1xf32> to vector<8x128xf32>
    %9 = arith.subf %5, %8 : vector<8x128xf32>
    %10 = math.exp %9 : vector<8x128xf32>
    %cst_6 = arith.constant dense<0.000000e+00> : vector<8xf32>
    %11 = vector.multi_reduction <add>, %10, %cst_6 [1] : vector<8x128xf32> to vector<8xf32>
    %12 = vector.shape_cast %11 : vector<8xf32> to vector<8x1xf32>
    %13 = tpu.reciprocal %12 {approx = true} : vector<8x1xf32> -> vector<8x1xf32>
    %14 = vector.broadcast %13 : vector<8x1xf32> to vector<8x128xf32>
    %15 = arith.mulf %10, %14 : vector<8x128xf32>
    %c0_7 = arith.constant 0 : index
    %c0_8 = arith.constant 0 : index
    %16 = vector.load %arg4[%c0_7, %c0_8] : memref<8x128xf32, #tpu.memory_space<vmem>>, vector<8x128xf32>
    tpu.vector_store %arg4[%c0_7, %c0_8], %15 {strides = array<i32>} : memref<8x128xf32, #tpu.memory_space<vmem>>, vector<8x128xf32>,
    return
  }
  func.func @transform_0(%arg0: i32) -> (i32, i32) {
    %c0_i32 = arith.constant 0 : i32
    %c0_i32_0 = arith.constant 0 : i32
    return %arg0, %c0_i32 : i32, i32
  }
  func.func @transform_1(%arg0: i32) -> (i32, i32) {
    %c0_i32 = arith.constant 0 : i32
    %c0_i32_0 = arith.constant 0 : i32
    %c0_i32_1 = arith.constant 0 : i32
    return %c0_i32, %c0_i32_0 : i32, i32
  }
  func.func @transform_2(%arg0: i32) -> (i32, i32) {
    %c0_i32 = arith.constant 0 : i32
    %c0_i32_0 = arith.constant 0 : i32
    %c0_i32_1 = arith.constant 0 : i32
    return %c0_i32, %c0_i32_0 : i32, i32
  }
  func.func @transform_3(%arg0: i32) -> (i32, i32) {
    %c0_i32 = arith.constant 0 : i32
    %c0_i32_0 = arith.constant 0 : i32
    return %arg0, %c0_i32 : i32, i32
  }
}

</mosaic_0001>

<llo_original>
// kernel: softmax_classifier.1
$region0: #{softmax_classifier.1}
  #allocation0 [shape = 'u32[]', space=smem, size = 0x4, offset = 0x4, fixed_abs, tag = 'smem constant byte address 0x4 - core index']
  #allocation1 [shape = 'u32[144,128]{1,0:T(1,128)}', space=vmem, size = 0x12000, scoped, tag = 'internal scratch']
  %s0 = inlined_call_operand.hbm [shape: bf16[8,32], index: 0, kind: input, shape index: {}]
  %s1 = inlined_call_operand.hbm [shape: bf16[32,128], index: 1, kind: input, shape index: {}]
  %s2 = inlined_call_operand.hbm [shape: f32[1,128], index: 2, kind: input, shape index: {}]
  %s3 = inlined_call_operand.hbm [shape: f32[8,128], index: 3, kind: output, shape index: {}]
  %s4 = sld [smem:[#allocation0]]
  $region34: #{softmax_classifier.1} parent=0
    _
  %s6 = ssub.s32 1, %s4
  %s7 = scalar_select 0, %s6, %s4
  $region1: #{softmax_classifier.1} parent=0
    #allocation2 [shape = 'u8[2048]{0}', space=vmem, size = 0x800, scoped, tag = 'input window, operand 0, single buffered']
    #allocation3 [shape = 's32[1]{0}', space=sflag, size = 0x4, scoped, tag = 'scoped memory for softmax_classifier.1']
    #allocation4 [shape = 's32[1]{0}', space=sflag, size = 0x4, scoped, tag = 'scoped memory for softmax_classifier.1']
    #allocation5 [shape = 'u8[8192]{0}', space=vmem, size = 0x2000, scoped, tag = 'input window, operand 1, single buffered']
    #allocation6 [shape = 's32[1]{0}', space=sflag, size = 0x4, scoped, tag = 'scoped memory for softmax_classifier.1']
    #allocation7 [shape = 'u8[512]{0}', space=vmem, size = 0x400, scoped, tag = 'input window, operand 2, single buffered']
    #allocation8 [shape = 'u8[4096]{0}', space=vmem, size = 0x1000, scoped, tag = 'output window, operand 0, single buffered']
    %8 = vsyncpa [#allocation3], 0
    %9 = vsyncpa [#allocation6], 0
    %10 = vsyncpa [#allocation4], 0
    // Predicated region
    $region2: #{softmax_classifier.1} parent=1 // pred_check
      _
    $region3: #{softmax_classifier.1} parent=1 // pred_check_branch
      %12 = sbr.rel (0) target = $region5
    $region4: #{softmax_classifier.1} parent=1 // pred_region
      %s14 = ssub.s32 64, 64
      %15 = vsyncadd [#allocation3], %s14
      %s17 = sshll.u32 [#allocation2], 4
      %s18 = int_to_ptr.vmem [resolvable:$true] %s17
      %20 = dma.hbm_to_vmem [thread:$0]  %s0, 64, %s18, [#allocation3]
    $region5: #{softmax_classifier.1} parent=1 // pred_fallthru
      _
    // Predicated region
    $region6: #{softmax_classifier.1} parent=1 // pred_check
      _
    $region7: #{softmax_classifier.1} parent=1 // pred_check_branch
      %22 = sbr.rel (0) target = $region9
    $region8: #{softmax_classifier.1} parent=1 // pred_region
      %s24 = ssub.s32 256, 256
      %25 = vsyncadd [#allocation6], %s24
      %s26 = sshll.u32 [#allocation5], 4
      %s27 = int_to_ptr.vmem [resolvable:$true] %s26
      %32 = dma.hbm_to_vmem [thread:$0]  %s1, 256, %s27, [#allocation6], 64, 64, 4
    $region9: #{softmax_classifier.1} parent=1 // pred_fallthru
      _
    // Predicated region
    $region10: #{softmax_classifier.1} parent=1 // pred_check
      _
    $region11: #{softmax_classifier.1} parent=1 // pred_check_branch
      %34 = sbr.rel (0) target = $region13
    $region12: #{softmax_classifier.1} parent=1 // pred_region
      %s36 = ssub.s32 16, 16
      %37 = vsyncadd [#allocation6], %s36
      %s39 = sshll.u32 [#allocation7], 4
      %s40 = int_to_ptr.vmem [resolvable:$true] %s39
      %42 = dma.hbm_to_vmem [thread:$0]  %s2, 16, %s40, [#allocation6]
    $region13: #{softmax_classifier.1} parent=1 // pred_fallthru
      _
    // Predicated region
    $region14: #{softmax_classifier.1} parent=1 // pred_check
      _
    $region15: #{softmax_classifier.1} parent=1 // pred_check_branch
      %44 = sbr.rel (0) target = $region17
    $region16: #{softmax_classifier.1} parent=1 // pred_region
      %45 = dma.done [#allocation3], 64
    $region17: #{softmax_classifier.1} parent=1 // pred_fallthru
      _
    // Predicated region
    $region18: #{softmax_classifier.1} parent=1 // pred_check
      _
    $region19: #{softmax_classifier.1} parent=1 // pred_check_branch
      %47 = sbr.rel (0) target = $region21
    $region20: #{softmax_classifier.1} parent=1 // pred_region
      %48 = dma.done [#allocation6], 256
    $region21: #{softmax_classifier.1} parent=1 // pred_fallthru
      _
    // Predicated region
    $region22: #{softmax_classifier.1} parent=1 // pred_check
      _
    $region23: #{softmax_classifier.1} parent=1 // pred_check_branch
      %50 = sbr.rel (0) target = $region25
    $region24: #{softmax_classifier.1} parent=1 // pred_region
      %51 = dma.done [#allocation6], 16
    $region25: #{softmax_classifier.1} parent=1 // pred_fallthru
      _
    %v53 = vld [vmem:[#allocation2] sm:$0xf]
    %v54 = vld [vmem:[#allocation5] sm:$0xf]
    %v55 = vld [vmem:[#allocation5 + $0x4] sm:$0xf]
    %v56 = vld [vmem:[#allocation5 + $0x8] sm:$0xf]
    %v57 = vld [vmem:[#allocation5 + $0xc] sm:$0xf]
    %v58 = vld [vmem:[#allocation7] sm:$0x1]
    %v60 = vlaneseq
    %v61 = vshrl.u32 %v60, 7
    %v62 = vsub.s32 0, %v61
    %v63 = vrot.slane %v58, %v62
    %v69 = vunpack.c.l.b16 %v54
    %v70 = vunpack.c.l.b16 %v55
    %v71 = vunpack.c.l.b16 %v56
    %v72 = vunpack.c.l.b16 %v57
    %v73 = vpack.c.b16 %v70, %v69
    %v74 = vpack.c.b16 %v72, %v71
    %vm77 = vcmask 261120
    %v79 = vsel %vm77, %v53, 0
    %81 = vmatprep.subr.bf16.mxu0 0
    %82 = vmatpush1.bf16.msra.mxu0 %v73
    %83 = vmatprep.subr.bf16.mxu0 0
    %84 = vmatpush1.bf16.msra.mxu0 %v74
    %85 = vmatprep.subr.bf16.mxu0 0
    %86 = vmatpush1.bf16.msra.mxu0 0
    %87 = vmatprep.subr.bf16.mxu0 0
    %88 = vmatpush1.bf16.msra.mxu0 0
    %89 = vmatprep.subr.bf16.mxu0 0
    %90 = vmatpush1.bf16.msra.mxu0 0
    %91 = vmatprep.subr.bf16.mxu0 0
    %92 = vmatpush1.bf16.msra.mxu0 0
    %93 = vmatprep.subr.bf16.mxu0 0
    %94 = vmatpush1.bf16.msra.mxu0 0
    %95 = vmatprep.subr.bf16.mxu0 0
    %96 = vmatpush1.bf16.msra.mxu0 0
    %97 = vmatprep.subr.bf16.mxu0 0
    %98 = vmatpush1.bf16.msra.mxu0 0
    %99 = vmatprep.subr.bf16.mxu0 0
    %100 = vmatpush1.bf16.msra.mxu0 0
    %101 = vmatprep.subr.bf16.mxu0 0
    %102 = vmatpush1.bf16.msra.mxu0 0
    %103 = vmatprep.subr.bf16.mxu0 0
    %104 = vmatpush1.bf16.msra.mxu0 0
    %105 = vmatprep.subr.bf16.mxu0 0
    %106 = vmatpush1.bf16.msra.mxu0 0
    %107 = vmatprep.subr.bf16.mxu0 0
    %108 = vmatpush1.bf16.msra.mxu0 0
    %109 = vmatprep.subr.bf16.mxu0 0
    %110 = vmatpush1.bf16.msra.mxu0 0
    %111 = vmatprep.subr.bf16.mxu0 0
    %112 = vmatpush1.bf16.msra.mxu0 0
    %113 = vmatprep.mubr.bf16.mxu0 0
    %114 = vmatmul.mubr.bf16.gmra.mrb[0].mxu0 %v79
    %v115 = vpop.f32.mrb[0].mxu0
    %v116 = vadd.f32 %v63, %v115
    %v117 = vpop.f32.mrb[0].mxu0
    %v118 = vpop.f32.mrb[0].mxu0
    %v119 = vpop.f32.mrb[0].mxu0
    %120 = vdwg.mxu0
    %121 = vmax.xlane.f32.xlu0 %v116
    %v122 = vpop.xlane.xlu0 %121
    %v123 = vsub.f32 %v116, %v122
    %v124 = vmul.f32 %v123, 1.442695
    %v125 = vpow.pop %v124
    %126 = vadd.xlane.f32.xlu0 %v125
    %v127 = vpop.xlane.xlu0 %126
    %v128 = vrcp.pop %v127
    %v129 = vmul.f32 %v125, %v128
    %130 = vst [vmem:[#allocation8] sm:$0xff] %v129
    // Predicated region
    $region26: #{softmax_classifier.1} parent=1 // pred_check
      _
    $region27: #{softmax_classifier.1} parent=1 // pred_check_branch
      %132 = sbr.rel (0) target = $region29
    $region28: #{softmax_classifier.1} parent=1 // pred_region
      %s134 = ssub.s32 128, 128
      %135 = vsyncadd [#allocation4], %s134
      %s137 = sshll.u32 [#allocation8], 4
      %s138 = int_to_ptr.vmem [resolvable:$true] %s137
      %140 = dma.vmem_to_hbm [thread:$0]  %s138, 128, %s3, [#allocation4]
    $region29: #{softmax_classifier.1} parent=1 // pred_fallthru
      _
    // Predicated region
    $region30: #{softmax_classifier.1} parent=1 // pred_check
      _
    $region31: #{softmax_classifier.1} parent=1 // pred_check_branch
      %142 = sbr.rel (0) target = $region33
    $region32: #{softmax_classifier.1} parent=1 // pred_region
      %143 = dma.done [#allocation4], 128
    $region33: #{softmax_classifier.1} parent=1 // pred_fallthru
      _
    %144 = vsyncpa [#allocation3], 1
    %145 = vsyncpa [#allocation6], 1
    %146 = vsyncpa [#allocation4], 1

</llo_original>
